<compile_context>
chip_gen: v7x
topology: tpu7x:2x2x1
jax: 0.10.0
libtpu: 0.0.40
codegen_flags: <defaults>
</compile_context>

<pallas_src>
import functools

import jax
import jax.numpy as jnp
from jax.experimental import pallas as pl
from jax.experimental.pallas import tpu as pltpu

_LANES = 128
_SUBLANES = 8
_MAX_TILE_ROWS = 1024          # (1024, 128) f32 block = 512 KiB
_NUM_PARTS = 2                 # megacore split (v7x); harmless on v5e/v6e


def _round_up(x, m):
    return ((x + m - 1) // m) * m


def _age_loss_kernel(pred_ref, targ_ref, out_ref, *, n_valid, rows_per_part,
                     tile_rows):
    """Accumulates per-lane partial sums of |d|, d^2 and smooth_l1(d)."""
    c = pl.program_id(0)            # core-split index ("parallel")
    i = pl.program_id(1)            # reduction step within split ("arbitrary")

    @pl.when(i == 0)
    def _init():
        out_ref[...] = jnp.zeros_like(out_ref)

    # Validity mask: covers both the 128-lane pad tail and any out-of-bounds
    # rows of a partial last block (which may contain garbage).
    row = jax.lax.broadcasted_iota(jnp.int32, (tile_rows, _LANES), 0)
    lane = jax.lax.broadcasted_iota(jnp.int32, (tile_rows, _LANES), 1)
    global_row = c * rows_per_part + i * tile_rows + row
    valid = global_row * _LANES + lane < n_valid

    p = pred_ref[0].astype(jnp.float32)
    t = targ_ref[0].astype(jnp.float32)
    d = jnp.where(valid, p - t, 0.0)
    ad = jnp.abs(d)
    sq = d * d
    # SmoothL1 / Huber with beta = 1.0
    hu = jnp.where(ad < 1.0, 0.5 * sq, ad - 0.5)

    # Sublane-only reduction per step; lane reduction is deferred to the
    # wrapper (keeps the accumulator as plain vreg/VMEM elementwise adds).
    out_ref[0, 0:1, :] += jnp.sum(ad, axis=0, keepdims=True)
    out_ref[0, 1:2, :] += jnp.sum(sq, axis=0, keepdims=True)
    out_ref[0, 2:3, :] += jnp.sum(hu, axis=0, keepdims=True)


def _loss_sums(pred_flat, targ_flat):
    """Returns (sum|d|, sum d^2, sum smooth_l1(d)) computed in Pallas."""
    n = pred_flat.shape[0]
    pad_unit = _NUM_PARTS * _SUBLANES * _LANES            # 2048 elements
    n_pad = _round_up(max(n, 1), pad_unit)
    if n_pad != n:
        # Single zero-fill pad (needed for the lane reshape); pad region gives
        # d == 0 and is additionally masked in-kernel.
        pred_flat = jnp.pad(pred_flat, (0, n_pad - n))
        targ_flat = jnp.pad(targ_flat, (0, n_pad - n))

    rows = n_pad // _LANES
    rows_per_part = rows // _NUM_PARTS                     # multiple of 8
    tile_rows = min(_MAX_TILE_ROWS, rows_per_part)         # multiple of 8
    steps = pl.cdiv(rows_per_part, tile_rows)

    pred3 = pred_flat.reshape(_NUM_PARTS, rows_per_part, _LANES)
    targ3 = targ_flat.reshape(_NUM_PARTS, rows_per_part, _LANES)

    in_spec = pl.BlockSpec((1, tile_rows, _LANES), lambda c, i: (c, i, 0))
    out_spec = pl.BlockSpec((1, 3, _LANES), lambda c, i: (c, 0, 0))

    kernel = functools.partial(
        _age_loss_kernel, n_valid=n, rows_per_part=rows_per_part,
        tile_rows=tile_rows)

    partial_sums = pl.pallas_call(
        kernel,
        out_shape=jax.ShapeDtypeStruct((_NUM_PARTS, 3, _LANES), jnp.float32),
        grid_spec=pltpu.PrefetchScalarGridSpec(
            num_scalar_prefetch=0,
            grid=(_NUM_PARTS, steps),
            in_specs=[in_spec, in_spec],
            out_specs=out_spec,
        ),
        compiler_params=pltpu.CompilerParams(
            dimension_semantics=("parallel", "arbitrary")),
    )(pred3, targ3)

    # Tiny cross-part + cross-lane reduction in plain JAX.
    return jnp.sum(partial_sums, axis=(0, 2))              # shape (3,)


@functools.partial(jax.jit, static_argnames=("loss_type", "weight_l1",
                                             "weight_l2", "weight_huber"))
def age_loss(predictions, targets, loss_type="l1",
             weight_l1=1.0, weight_l2=0.0, weight_huber=0.0):
    """JAX/Pallas equivalent of AgeLoss.forward (defaults match PyTorch)."""
    pred_flat = predictions.reshape(-1)
    targ_flat = targets.reshape(-1)
    n = pred_flat.shape[0]

    sums = _loss_sums(pred_flat, targ_flat)
    inv_n = 1.0 / float(n)
    mean_l1 = sums[0] * inv_n
    mean_l2 = sums[1] * inv_n
    mean_huber = sums[2] * inv_n       # SmoothL1(beta=1.0) == Huber here

    if loss_type == "l1":
        total = mean_l1
    elif loss_type == "l2":
        total = mean_l2
    elif loss_type in ("huber", "smooth_l1"):
        total = mean_huber
    else:
        raise ValueError(f"Unknown loss type: {loss_type}")

    if weight_l1 > 0:
        total = total + weight_l1 * mean_l1
    if weight_l2 > 0:
        total = total + weight_l2 * mean_l2
    if weight_huber > 0:
        total = total + weight_huber * mean_huber
    return total


if __name__ == "__main__":
    k0, k1, k2, k3 = jax.random.split(jax.random.PRNGKey(0), 4)

    # Case 1: tiny age batch (batch=2, heads=8) -> 16 scalars.
    # Exercises the padded + in-kernel-masked path.
    p1 = jax.random.uniform(k0, (2, 8), jnp.float32) * 100.0
    t1 = jax.random.uniform(k1, (2, 8), jnp.float32) * 100.0
    loss1 = jax.block_until_ready(age_loss(p1, t1))
    d1 = (p1 - t1).reshape(-1)
    ref1 = 2.0 * jnp.mean(jnp.abs(d1))     # l1 primary + weight_l1=1.0
    assert jnp.allclose(loss1, ref1, rtol=1e-4, atol=1e-4), (loss1, ref1)

    # Case 2: (2, 4, 16, 16) = 2048 elements -> zero-copy path; huber + L2 mix.
    p2 = jax.random.uniform(k2, (2, 4, 16, 16), jnp.float32) * 100.0
    t2 = jax.random.uniform(k3, (2, 4, 16, 16), jnp.float32) * 100.0
    loss2 = jax.block_until_ready(
        age_loss(p2, t2, loss_type="huber", weight_l1=0.0, weight_l2=0.3,
                 weight_huber=0.0))
    d2 = (p2 - t2).reshape(-1)
    ad2 = jnp.abs(d2)
    ref2 = (jnp.mean(jnp.where(ad2 < 1.0, 0.5 * d2 * d2, ad2 - 0.5))
            + 0.3 * jnp.mean(d2 * d2))
    assert jnp.allclose(loss2, ref2, rtol=1e-4, atol=1e-4), (loss2, ref2)

    print("KERNEL_OK")
</pallas_src>

<mosaic_0001>
module attributes {stable_mosaic.version = 11 : i64} {
  func.func @_age_loss_kernel(%arg0: i32, %arg1: i32, %arg2: memref<1x8x128xf32, #tpu.memory_space<vmem>>, %arg3: memref<1x8x128xf32, #tpu.memory_space<vmem>>, %arg4: memref<1x3x128xf32, #tpu.memory_space<vmem>>) attributes {dimension_semantics = [#tpu.dimension_semantics<parallel>, #tpu.dimension_semantics<arbitrary>], iteration_bounds = array<i64: 2, 1>, scalar_prefetch = 0 : i64, scratch_operands = 0 : i64, tpu.core_type = #tpu.core_type<tc>, window_params = [{transform_indices = @transform_0, window_bounds = array<i64: 1, 8, 128>}, {transform_indices = @transform_1, window_bounds = array<i64: 1, 8, 128>}, {transform_indices = @transform_2, window_bounds = array<i64: 1, 3, 128>}]} {
    %c0_i32 = arith.constant 0 : i32
    %0 = arith.cmpi eq, %arg1, %c0_i32 : i32
    %1 = arith.extui %0 : i1 to i32
    %c0_i32_0 = arith.constant 0 : i32
    %2 = arith.cmpi ne, %1, %c0_i32_0 : i32
    scf.if %2 {
      %cst_29 = arith.constant 0.000000e+00 : f32
      %55 = vector.broadcast %cst_29 : f32 to vector<1x3x128xf32>
      %c0_30 = arith.constant 0 : index
      %c0_31 = arith.constant 0 : index
      %c0_32 = arith.constant 0 : index
      %56 = vector.load %arg4[%c0_30, %c0_31, %c0_32] : memref<1x3x128xf32, #tpu.memory_space<vmem>>, vector<1x3x128xf32>
      tpu.vector_store %arg4[%c0_30, %c0_31, %c0_32], %55 {strides = array<i32>} : memref<1x3x128xf32, #tpu.memory_space<vmem>>, vector<1x3x128xf32>,
    } else {
    }
    %3 = tpu.iota {dimensions = array<i32: 0>} : vector<8x128xi32>
    %4 = tpu.iota {dimensions = array<i32: 1>} : vector<8x128xi32>
    %c8_i32 = arith.constant 8 : i32
    %5 = arith.muli %arg0, %c8_i32 : i32
    %c8_i32_1 = arith.constant 8 : i32
    %6 = arith.muli %arg1, %c8_i32_1 : i32
    %7 = arith.addi %5, %6 : i32
    %8 = vector.broadcast %7 : i32 to vector<8x128xi32>
    %9 = arith.addi %8, %3 : vector<8x128xi32>
    %c128_i32 = arith.constant 128 : i32
    %10 = vector.broadcast %c128_i32 : i32 to vector<8x128xi32>
    %11 = arith.muli %9, %10 : vector<8x128xi32>
    %12 = arith.addi %11, %4 : vector<8x128xi32>
    %c16_i32 = arith.constant 16 : i32
    %13 = vector.broadcast %c16_i32 : i32 to vector<8x128xi32>
    %14 = arith.cmpi slt, %12, %13 : vector<8x128xi32>
    %c0 = arith.constant 0 : index
    %c0_2 = arith.constant 0 : index
    %c0_3 = arith.constant 0 : index
    %15 = vector.load %arg2[%c0, %c0_2, %c0_3] : memref<1x8x128xf32, #tpu.memory_space<vmem>>, vector<1x8x128xf32>
    %16 = vector.shape_cast %15 : vector<1x8x128xf32> to vector<8x128xf32>
    %c0_4 = arith.constant 0 : index
    %c0_5 = arith.constant 0 : index
    %c0_6 = arith.constant 0 : index
    %17 = vector.load %arg3[%c0_4, %c0_5, %c0_6] : memref<1x8x128xf32, #tpu.memory_space<vmem>>, vector<1x8x128xf32>
    %18 = vector.shape_cast %17 : vector<1x8x128xf32> to vector<8x128xf32>
    %19 = arith.subf %16, %18 : vector<8x128xf32>
    %cst = arith.constant 0.000000e+00 : f32
    %20 = vector.broadcast %cst : f32 to vector<8x128xf32>
    %21 = arith.select %14, %19, %20 : vector<8x128xi1>, vector<8x128xf32>
    %22 = math.absf %21 : vector<8x128xf32>
    %23 = arith.mulf %21, %21 : vector<8x128xf32>
    %cst_7 = arith.constant 1.000000e+00 : f32
    %24 = vector.broadcast %cst_7 : f32 to vector<8x128xf32>
    %25 = arith.cmpf olt, %22, %24 : vector<8x128xf32>
    %cst_8 = arith.constant 5.000000e-01 : f32
    %26 = vector.broadcast %cst_8 : f32 to vector<8x128xf32>
    %27 = arith.mulf %26, %23 : vector<8x128xf32>
    %cst_9 = arith.constant 5.000000e-01 : f32
    %28 = vector.broadcast %cst_9 : f32 to vector<8x128xf32>
    %29 = arith.subf %22, %28 : vector<8x128xf32>
    %30 = arith.select %25, %27, %29 : vector<8x128xi1>, vector<8x128xf32>
    %c0_10 = arith.constant 0 : index
    %c0_11 = arith.constant 0 : index
    %c0_12 = arith.constant 0 : index
    %31 = vector.load %arg4[%c0_10, %c0_11, %c0_12] : memref<1x3x128xf32, #tpu.memory_space<vmem>>, vector<1x1x128xf32>
    %32 = vector.shape_cast %31 : vector<1x1x128xf32> to vector<1x128xf32>
    %cst_13 = arith.constant dense<0.000000e+00> : vector<128xf32>
    %33 = vector.multi_reduction <add>, %22, %cst_13 [0] : vector<8x128xf32> to vector<128xf32>
    %34 = vector.shape_cast %33 : vector<128xf32> to vector<1x128xf32>
    %35 = arith.addf %32, %34 : vector<1x128xf32>
    %c0_14 = arith.constant 0 : index
    %c0_15 = arith.constant 0 : index
    %c0_16 = arith.constant 0 : index
    %36 = vector.load %arg4[%c0_14, %c0_15, %c0_16] : memref<1x3x128xf32, #tpu.memory_space<vmem>>, vector<1x1x128xf32>
    %37 = vector.shape_cast %36 : vector<1x1x128xf32> to vector<1x128xf32>
    %38 = vector.shape_cast %35 : vector<1x128xf32> to vector<1x1x128xf32>
    tpu.vector_store %arg4[%c0_14, %c0_15, %c0_16], %38 {strides = array<i32>} : memref<1x3x128xf32, #tpu.memory_space<vmem>>, vector<1x1x128xf32>,
    %c0_17 = arith.constant 0 : index
    %c1 = arith.constant 1 : index
    %c0_18 = arith.constant 0 : index
    %39 = vector.load %arg4[%c0_17, %c1, %c0_18] : memref<1x3x128xf32, #tpu.memory_space<vmem>>, vector<1x1x128xf32>
    %40 = vector.shape_cast %39 : vector<1x1x128xf32> to vector<1x128xf32>
    %cst_19 = arith.constant dense<0.000000e+00> : vector<128xf32>
    %41 = vector.multi_reduction <add>, %23, %cst_19 [0] : vector<8x128xf32> to vector<128xf32>
    %42 = vector.shape_cast %41 : vector<128xf32> to vector<1x128xf32>
    %43 = arith.addf %40, %42 : vector<1x128xf32>
    %c0_20 = arith.constant 0 : index
    %c1_21 = arith.constant 1 : index
    %c0_22 = arith.constant 0 : index
    %44 = vector.load %arg4[%c0_20, %c1_21, %c0_22] : memref<1x3x128xf32, #tpu.memory_space<vmem>>, vector<1x1x128xf32>
    %45 = vector.shape_cast %44 : vector<1x1x128xf32> to vector<1x128xf32>
    %46 = vector.shape_cast %43 : vector<1x128xf32> to vector<1x1x128xf32>
    tpu.vector_store %arg4[%c0_20, %c1_21, %c0_22], %46 {strides = array<i32>} : memref<1x3x128xf32, #tpu.memory_space<vmem>>, vector<1x1x128xf32>,
    %c0_23 = arith.constant 0 : index
    %c2 = arith.constant 2 : index
    %c0_24 = arith.constant 0 : index
    %47 = vector.load %arg4[%c0_23, %c2, %c0_24] : memref<1x3x128xf32, #tpu.memory_space<vmem>>, vector<1x1x128xf32>
    %48 = vector.shape_cast %47 : vector<1x1x128xf32> to vector<1x128xf32>
    %cst_25 = arith.constant dense<0.000000e+00> : vector<128xf32>
    %49 = vector.multi_reduction <add>, %30, %cst_25 [0] : vector<8x128xf32> to vector<128xf32>
    %50 = vector.shape_cast %49 : vector<128xf32> to vector<1x128xf32>
    %51 = arith.addf %48, %50 : vector<1x128xf32>
    %c0_26 = arith.constant 0 : index
    %c2_27 = arith.constant 2 : index
    %c0_28 = arith.constant 0 : index
    %52 = vector.load %arg4[%c0_26, %c2_27, %c0_28] : memref<1x3x128xf32, #tpu.memory_space<vmem>>, vector<1x1x128xf32>
    %53 = vector.shape_cast %52 : vector<1x1x128xf32> to vector<1x128xf32>
    %54 = vector.shape_cast %51 : vector<1x128xf32> to vector<1x1x128xf32>
    tpu.vector_store %arg4[%c0_26, %c2_27, %c0_28], %54 {strides = array<i32>} : memref<1x3x128xf32, #tpu.memory_space<vmem>>, vector<1x1x128xf32>,
    return
  }
  func.func @transform_0(%arg0: i32, %arg1: i32) -> (i32, i32, i32) {
    %c0_i32 = arith.constant 0 : i32
    %c0_i32_0 = arith.constant 0 : i32
    return %arg0, %arg1, %c0_i32 : i32, i32, i32
  }
  func.func @transform_1(%arg0: i32, %arg1: i32) -> (i32, i32, i32) {
    %c0_i32 = arith.constant 0 : i32
    %c0_i32_0 = arith.constant 0 : i32
    return %arg0, %arg1, %c0_i32 : i32, i32, i32
  }
  func.func @transform_2(%arg0: i32, %arg1: i32) -> (i32, i32, i32) {
    %c0_i32 = arith.constant 0 : i32
    %c0_i32_0 = arith.constant 0 : i32
    %c0_i32_1 = arith.constant 0 : i32
    return %arg0, %c0_i32, %c0_i32_0 : i32, i32, i32
  }
}

</mosaic_0001>

<llo_original>
// kernel: age_loss.1
$region0: #{age_loss.1}
  #allocation0 [shape = 'u32[]', space=smem, size = 0x4, offset = 0x4, fixed_abs, tag = 'smem constant byte address 0x4 - core index']
  #allocation1 [shape = 'u32[144,128]{1,0:T(1,128)}', space=vmem, size = 0x12000, scoped, tag = 'internal scratch']
  %s0 = inlined_call_operand.vmem [shape: f32[2,8,128], index: 0, kind: input, shape index: {}]
  %s1 = inlined_call_operand.vmem [shape: f32[2,8,128], index: 1, kind: input, shape index: {}]
  %s2 = inlined_call_operand.vmem [shape: f32[2,3,128], index: 2, kind: output, shape index: {}]
  %s3 = sld [smem:[#allocation0]]
  $region45: #{age_loss.1} parent=0
    _
  %s5 = ssub.s32 1, %s3
  %s6 = scalar_select 0, %s5, %s3
  loop: start=0, step=1, limit=4
  $region2: #{age_loss.1} parent=0 // loop_pre_header
    _
  $region3: #{age_loss.1} parent=0 // loop_header
    %s8 = sphi 0, %s12
    %p9 = scmp.ge.s32.totalorder %s8, 4
    %s15 = sphi 0, %s27
    %s16 = sphi 0, %s23
    %s17 = sphi 0, %s15
    %s18 = sphi 0, %s16
    %s19 = sphi 0, %s17
    %s20 = sphi 0, %s18
    %s32 = sphi 0, %s34
    %s35 = sphi 0, %s32
    %s36 = sphi 0, %s35
    %s52 = sphi 0, %s36
    %s60 = sphi 0, %s62
    %s63 = sphi 0, %s60
    %s64 = sphi 0, %s63
    %s80 = sphi 0, %s64
    %s86 = sphi 0, %s88
    %s89 = sphi 0, %s86
    %s90 = sphi 0, %s89
    %s106 = sphi 0, %s90
  $region4: #{age_loss.1} parent=0 // loop_header_branch
    %11 = sbr.rel (%p9) target = $region8
  $region5: #{age_loss.1} parent=0 // loop_body
    %s13 = ssub.s32 %s8, 1
    %s14 = ssub.s32 %s8, 2
    %s21 = sadd.s32 1, %s16
    %p22 = scmp.ge.s32.totalorder %s21, 1
    %s23 = scalar_select %p22, 0, %s21
    %s24 = sadd.s32 1, %s15
    %s25 = scalar_select %p22, %s24, %s15
    %p26 = scmp.ge.s32.totalorder %s25, 2
    %s27 = scalar_select %p26, 0, %s25
    %s28 = ssub.s32 %s15, %s27
    %s29 = ssub.s32 %s16, %s23
    %s30 = sor.u32 %s28, %s29
    %p31 = scmp.eq.s32.totalorder %s30, 0
    %s33 = sadd.s32 %s32, 1
    %s34 = scalar_select %p31, %s32, %s33
    %p37 = pneg %p31
    %p38 = scmp.eq.s32.totalorder %s8, 1
    %p39 = por %p37, %p38
    %p40 = scmp.ne.s32.totalorder %s32, %s35
    %p41 = scmp.eq.s32.totalorder %s8, 0
    %p42 = por %p40, %p41
    %p43 = scmp.ne.s32.totalorder %s32, %s35
    %p44 = scmp.eq.s32.totalorder %s13, 1
    %p45 = por %p43, %p44
    %p46 = scmp.ne.s32.totalorder %s35, %s36
    %p47 = scmp.eq.s32.totalorder %s13, 0
    %p48 = por %p46, %p47
    %p49 = scmp.ne.s32.totalorder %s35, %s36
    %p50 = scmp.eq.s32.totalorder %s14, 1
    %p51 = por %p49, %p50
    %p53 = scmp.ne.s32.totalorder %s36, %s52
    %p54 = scmp.eq.s32.totalorder %s14, 0
    %p55 = por %p53, %p54
    %s56 = ssub.s32 %s15, %s27
    %s57 = ssub.s32 %s16, %s23
    %s58 = sor.u32 %s56, %s57
    %p59 = scmp.eq.s32.totalorder %s58, 0
    %s61 = sadd.s32 %s60, 1
    %s62 = scalar_select %p59, %s60, %s61
    %p65 = pneg %p59
    %p66 = scmp.eq.s32.totalorder %s8, 1
    %p67 = por %p65, %p66
    %p68 = scmp.ne.s32.totalorder %s60, %s63
    %p69 = scmp.eq.s32.totalorder %s8, 0
    %p70 = por %p68, %p69
    %p71 = scmp.ne.s32.totalorder %s60, %s63
    %p72 = scmp.eq.s32.totalorder %s13, 1
    %p73 = por %p71, %p72
    %p74 = scmp.ne.s32.totalorder %s63, %s64
    %p75 = scmp.eq.s32.totalorder %s13, 0
    %p76 = por %p74, %p75
    %p77 = scmp.ne.s32.totalorder %s63, %s64
    %p78 = scmp.eq.s32.totalorder %s14, 1
    %p79 = por %p77, %p78
    %p81 = scmp.ne.s32.totalorder %s64, %s80
    %p82 = scmp.eq.s32.totalorder %s14, 0
    %p83 = por %p81, %p82
    %s84 = ssub.s32 %s15, %s27
    %p85 = scmp.eq.s32.totalorder %s84, 0
    %s87 = sadd.s32 %s86, 1
    %s88 = scalar_select %p85, %s86, %s87
    %p91 = pneg %p85
    %p92 = scmp.eq.s32.totalorder %s8, 1
    %p93 = por %p91, %p92
    %p94 = scmp.ne.s32.totalorder %s86, %s89
    %p95 = scmp.eq.s32.totalorder %s8, 0
    %p96 = por %p94, %p95
    %p97 = scmp.ne.s32.totalorder %s86, %s89
    %p98 = scmp.eq.s32.totalorder %s13, 1
    %p99 = por %p97, %p98
    %p100 = scmp.ne.s32.totalorder %s89, %s90
    %p101 = scmp.eq.s32.totalorder %s13, 0
    %p102 = por %p100, %p101
    %p103 = scmp.ne.s32.totalorder %s89, %s90
    %p104 = scmp.eq.s32.totalorder %s14, 1
    %p105 = por %p103, %p104
    %p107 = scmp.ne.s32.totalorder %s90, %s106
    %p108 = scmp.eq.s32.totalorder %s14, 0
    %p109 = por %p107, %p108
    %p110 = scmp.le.s32.totalorder 1, %s8
    %p111 = scmp.lt.s32.totalorder %s8, 3
    %p112 = pnand %p110, %p111
    %p113 = pneg %p112
    // Predicated region
    $region9: #{age_loss.1} parent=5 // pred_check
      _
    $region10: #{age_loss.1} parent=5 // pred_check_branch
      %115 = sbr.rel (%p112) target = $region12
    $region11: #{age_loss.1} parent=5 // pred_region
      %s116 = ssub.s32 %s8, 1
    $region12: #{age_loss.1} parent=5 // pred_fallthru
      _
    %p117 = scmp.lt.s32.totalorder %s8, 2
    // Predicated region
    $region13: #{age_loss.1} parent=5 // pred_check
      %p118 = pneg %p117
    $region14: #{age_loss.1} parent=5 // pred_check_branch
      %120 = sbr.rel (%p118) target = $region16
    $region15: #{age_loss.1} parent=5 // pred_region
      // Predicated region
      $region17: #{age_loss.1} parent=15 // pred_check
        %p121 = pneg %p42
      $region18: #{age_loss.1} parent=15 // pred_check_branch
        %123 = sbr.rel (%p121) target = $region20
      $region19: #{age_loss.1} parent=15 // pred_region
        %p124 = scmp.lt.s32.totalorder %s15, 1
        %s125 = scalar_select %p124, %s15, 1
        %p126 = scmp.lt.s32.totalorder %s16, 0
        %s127 = scalar_select %p126, %s16, 0
        %s128 = sadd.s32 %s127, %s125
        %s129 = smul.addr %s128, 8
        %s130 = scalar_lea.vmem %s0, %s129
      $region20: #{age_loss.1} parent=15 // pred_fallthru
        _
      // Predicated region
      $region21: #{age_loss.1} parent=15 // pred_check
        %p131 = pneg %p70
      $region22: #{age_loss.1} parent=15 // pred_check_branch
        %133 = sbr.rel (%p131) target = $region24
      $region23: #{age_loss.1} parent=15 // pred_region
        %p134 = scmp.lt.s32.totalorder %s15, 1
        %s135 = scalar_select %p134, %s15, 1
        %p136 = scmp.lt.s32.totalorder %s16, 0
        %s137 = scalar_select %p136, %s16, 0
        %s138 = sadd.s32 %s137, %s135
        %s139 = smul.addr %s138, 8
        %s140 = scalar_lea.vmem %s1, %s139
      $region24: #{age_loss.1} parent=15 // pred_fallthru
        _
    $region16: #{age_loss.1} parent=5 // pred_fallthru
      _
    %p141 = scmp.le.s32.totalorder 1, %s8
    %p142 = scmp.lt.s32.totalorder %s8, 3
    %p143 = pnand %p141, %p142
    %p144 = pneg %p143
    // Predicated region
    $region25: #{age_loss.1} parent=5 // pred_check
      _
    $region26: #{age_loss.1} parent=5 // pred_check_branch
      %146 = sbr.rel (%p143) target = $region28
    $region27: #{age_loss.1} parent=5 // pred_region
      %s147 = ssub.s32 %s8, 1
      %p148 = scmp.lt.s32.totalorder %s17, 1
      %s149 = scalar_select %p148, %s17, 1
      %p150 = scmp.lt.s32.totalorder %s18, 0
      %s151 = scalar_select %p150, %s18, 0
      %s152 = sadd.s32 %s151, %s149
      %s153 = smul.addr %s152, 8
      %s154 = scalar_lea.vmem %s0, %s153
      %p155 = pneg %p48
      %p156 = pneg %p45
      %p157 = scmp.lt.s32.totalorder %s17, 1
      %s158 = scalar_select %p157, %s17, 1
      %p159 = scmp.lt.s32.totalorder %s18, 0
      %s160 = scalar_select %p159, %s18, 0
      %s161 = sadd.s32 %s160, %s158
      %s162 = smul.addr %s161, 8
      %s163 = scalar_lea.vmem %s1, %s162
      %p164 = pneg %p76
      %p165 = pneg %p73
      %p166 = pneg %p102
      %p167 = pneg %p99
      %p168 = scmp.lt.s32.totalorder %s17, 1
      %s169 = scalar_select %p168, %s17, 1
      %s170 = smul.addr %s169, 4
      %s171 = scalar_lea.vmem %s2, %s170
      %p172 = scmp.lt.s32.totalorder %s17, 1
      %s173 = scalar_select %p172, %s17, 1
      %p174 = scmp.lt.s32.totalorder %s18, 0
      %s175 = scalar_select %p174, %s18, 0
      %s176 = sadd.s32 %s175, %s173
      %s177 = smul.addr %s176, 8
      %s178 = scalar_lea.vmem %s0, %s177
      %p179 = scmp.lt.s32.totalorder %s17, 1
      %s180 = scalar_select %p179, %s17, 1
      %p181 = scmp.lt.s32.totalorder %s18, 0
      %s182 = scalar_select %p181, %s18, 0
      %s183 = sadd.s32 %s182, %s180
      %s184 = smul.addr %s183, 8
      %s185 = scalar_lea.vmem %s1, %s184
      %p186 = scmp.lt.s32.totalorder %s17, 1
      %s187 = scalar_select %p186, %s17, 1
      %s188 = smul.addr %s187, 4
      %s189 = scalar_lea.vmem %s2, %s188
      %p190 = scmp.eq.s32.totalorder %s18, 0
      // Predicated region
      $region29: #{age_loss.1} parent=27 // pred_check
        %p191 = pneg %p190
      $region30: #{age_loss.1} parent=27 // pred_check_branch
        %193 = sbr.rel (%p191) target = $region32
      $region31: #{age_loss.1} parent=27 // pred_region
        %194 = vst [vmem:[%s189] sm:$0x7] 0.0
      $region32: #{age_loss.1} parent=27 // pred_fallthru
        _
      %v195 = vlaneseq
      %v196 = vshrl.u32 %v195, 7
      %v197 = vlaneseq
      %v198 = vand.u32 %v197, 127
      %s199 = smul.u32 %s17, 8
      %s200 = smul.u32 %s18, 8
      %s201 = sadd.s32 %s199, %s200
      %v202 = vstv %s201
      %v203 = vadd.s32 %v202, %v196
      %v204 = vmul.u32 %v203, 128
      %v205 = vadd.s32 %v204, %v198
      %vm206 = vcmp.lt.s32.totalorder %v205, 16
      %v207 = vld [vmem:[%s178] sm:$0xff]
      %v208 = vld [vmem:[%s185] sm:$0xff]
      %v209 = vsub.f32 %v207, %v208
      %v210 = vsel %vm206, %v209, 0.0
      %v211 = vand.u32 2147483647, %v210
      %v212 = vmul.f32 %v210, %v210
      %vm213 = vcmp.lt.f32.partialorder %v211, 1.0
      %v214 = vmul.f32 %v212, 0.5
      %v215 = vsub.f32 %v211, 0.5
      %v216 = vsel %vm213, %v214, %v215
      %v217 = vld [vmem:[%s189] sm:$0x1]
      %v218 = vrot.slane %v211, 4
      %v219 = vadd.f32 %v211, %v218
      %v220 = vrot.slane %v219, 2
      %v221 = vadd.f32 %v219, %v220
      %v222 = vrot.slane %v221, 1
      %v223 = vadd.f32 %v221, %v222
      %v224 = vadd.f32 %v217, %v223
      %225 = vst [vmem:[%s189] sm:$0x1] %v224
      %v226 = vld [vmem:[%s189 + $0x1] sm:$0x1]
      %v227 = vrot.slane %v212, 4
      %v228 = vadd.f32 %v212, %v227
      %v229 = vrot.slane %v228, 2
      %v230 = vadd.f32 %v228, %v229
      %v231 = vrot.slane %v230, 1
      %v232 = vadd.f32 %v230, %v231
      %v233 = vadd.f32 %v226, %v232
      %234 = vst [vmem:[%s189 + $0x1] sm:$0x1] %v233
      %v235 = vld [vmem:[%s189 + $0x2] sm:$0x1]
      %v236 = vrot.slane %v216, 4
      %v237 = vadd.f32 %v216, %v236
      %v238 = vrot.slane %v237, 2
      %v239 = vadd.f32 %v237, %v238
      %v240 = vrot.slane %v239, 1
      %v241 = vadd.f32 %v239, %v240
      %v242 = vadd.f32 %v235, %v241
      %243 = vst [vmem:[%s189 + $0x2] sm:$0x1] %v242
      %p244 = scmp.lt.s32.totalorder %s17, 1
      %s245 = scalar_select %p244, %s17, 1
      %s246 = smul.addr %s245, 4
      %s247 = scalar_lea.vmem %s2, %s246
      // Predicated region
      $region33: #{age_loss.1} parent=27 // pred_check
        %p248 = pneg %p99
      $region34: #{age_loss.1} parent=27 // pred_check_branch
        %250 = sbr.rel (%p248) target = $region36
      $region35: #{age_loss.1} parent=27 // pred_region
        _
      $region36: #{age_loss.1} parent=27 // pred_fallthru
        _
    $region28: #{age_loss.1} parent=5 // pred_fallthru
      _
    %p251 = scmp.le.s32.totalorder 2, %s8
    // Predicated region
    $region37: #{age_loss.1} parent=5 // pred_check
      %p252 = pneg %p251
    $region38: #{age_loss.1} parent=5 // pred_check_branch
      %254 = sbr.rel (%p252) target = $region40
    $region39: #{age_loss.1} parent=5 // pred_region
      %s255 = ssub.s32 %s8, 2
      // Predicated region
      $region41: #{age_loss.1} parent=39 // pred_check
        %p256 = pneg %p105
      $region42: #{age_loss.1} parent=39 // pred_check_branch
        %258 = sbr.rel (%p256) target = $region44
      $region43: #{age_loss.1} parent=39 // pred_region
        %p259 = scmp.lt.s32.totalorder %s19, 1
        %s260 = scalar_select %p259, %s19, 1
        %s261 = smul.addr %s260, 4
        %s262 = scalar_lea.vmem %s2, %s261
      $region44: #{age_loss.1} parent=39 // pred_fallthru
        _
    $region40: #{age_loss.1} parent=5 // pred_fallthru
      _
  $region6: #{age_loss.1} parent=0 // loop_footer
    %s12 = sadd.s32 1, %s8
  $region7: #{age_loss.1} parent=0 // loop_footer_branch
    %7 = sbr.rel target = $region3
  $region8: #{age_loss.1} parent=0 // loop_exit
    _

</llo_original>
